<compile_context>
chip_gen: v7x
topology: tpu7x:2x2x1
jax: 0.10.0
libtpu: 0.0.40
codegen_flags: <defaults>
</compile_context>

<pallas_src>
import jax
import jax.numpy as jnp
from jax.experimental import pallas as pl
from jax.experimental.pallas import tpu as pltpu


def _round_up(v: int, m: int) -> int:
    return ((v + m - 1) // m) * m


def _cdiv(a: int, b: int) -> int:
    return (a + b - 1) // b


def _k_tiling(D: int, block_k: int):
    """Contraction tile size and padded contraction extent (tk divides d_pad)."""
    tk = min(_round_up(block_k, 128), _round_up(D, 128))
    d_pad = _round_up(D, tk)
    return tk, d_pad


def _fused_linear_kernel(x_ref, w_ref, b_ref, o_ref, acc_ref):
    k = pl.program_id(1)

    @pl.when(k == 0)
    def _():
        acc_ref[...] = jnp.zeros_like(acc_ref)

    # Cast x to bf16 in-kernel (free VPU work under the DMAs); f32 MXU accumulate.
    acc_ref[...] += jnp.dot(
        x_ref[...].astype(jnp.bfloat16),
        w_ref[...],
        preferred_element_type=jnp.float32,
    )

    @pl.when(k == pl.num_programs(1) - 1)
    def _():
        o_ref[...] = (acc_ref[...] + b_ref[...]).astype(o_ref.dtype)


def fuse_params(w_bb, b_bb, w_fc, b_fc, *, block_k: int = 2048):
    """One-time (model-load) fusion of backbone-linear + fc_out.

    Returns the K/lane-padded bf16 fused weight and the f32 fused bias.
    """
    D = w_bb.shape[0]
    out_dim = w_fc.shape[1]

    w_eff = jnp.dot(w_bb, w_fc, preferred_element_type=jnp.float32)           # (D, out_dim)
    b_eff = (jnp.dot(b_bb[None, :], w_fc, preferred_element_type=jnp.float32)
             + b_fc[None, :])                                                 # (1, out_dim)

    tk, d_pad = _k_tiling(D, block_k)
    del tk
    n_pad = _round_up(out_dim, 128)   # lane-dense output; do NOT pad further

    w_p = (jnp.zeros((d_pad, n_pad), jnp.bfloat16)
           .at[:D, :out_dim].set(w_eff.astype(jnp.bfloat16)))
    b_p = jnp.zeros((1, n_pad), jnp.float32).at[:, :out_dim].set(b_eff)
    return w_p, b_p


def linear_transferred(x, w_p, b_p, out_dim, *, block_b: int = 512,
                       block_k: int = 2048):
    """x: (B, C, H, W) f32; (w_p, b_p) from fuse_params. Returns (B, out_dim) f32."""
    B = x.shape[0]
    D = x.shape[1] * x.shape[2] * x.shape[3]
    d_pad, n_pad = w_p.shape
    tk, d_pad_chk = _k_tiling(D, block_k)
    assert d_pad == d_pad_chk, "fuse_params/block_k mismatch"

    # ---- batch tiling: multiple of 16 rows, small padding waste, and >= 2
    # tiles whenever B allows so v7x's second TensorCore gets work. ----
    n_tiles = max(1, _cdiv(B, block_b))
    if B >= 32:
        n_tiles = max(2, n_tiles)
    tb = min(block_b, _round_up(_cdiv(B, n_tiles), 16))
    b_pad = _round_up(B, tb)

    x_flat = x.reshape(B, D)
    if b_pad != B or d_pad != D:
        # Single f32 pad; no separate bf16 copy (the cast happens in-kernel).
        x_in = jnp.zeros((b_pad, d_pad), x_flat.dtype).at[:B, :D].set(x_flat)
    else:
        x_in = x_flat

    grid = (b_pad // tb, d_pad // tk)

    # Scoped-VMEM budget from the actual tile footprint (+ headroom), so the
    # default 16 MiB (v5e) / 32 MiB (v6e, v7x) limits never force tiny tiles.
    vmem_bytes = (
        2 * tb * tk * 4            # x tiles (f32, double-buffered)
        + 2 * tk * n_pad * 2       # fused-weight tiles (bf16, double-buffered)
        + 2 * 1 * n_pad * 4        # fused bias
        + 2 * tb * n_pad * 4       # output tiles (f32, double-buffered)
        + tb * n_pad * 4           # accumulator scratch
    )
    vmem_limit = int(min(2 * vmem_bytes + (4 << 20), 48 << 20))

    out_padded = pl.pallas_call(
        _fused_linear_kernel,
        out_shape=jax.ShapeDtypeStruct((b_pad, n_pad), jnp.float32),
        grid_spec=pltpu.PrefetchScalarGridSpec(
            num_scalar_prefetch=0,
            grid=grid,
            in_specs=[
                pl.BlockSpec((tb, tk), lambda i, k: (i, k)),      # x (f32)
                pl.BlockSpec((tk, n_pad), lambda i, k: (k, 0)),   # fused W (bf16)
                pl.BlockSpec((1, n_pad), lambda i, k: (0, 0)),    # fused bias (f32)
            ],
            out_specs=pl.BlockSpec((tb, n_pad), lambda i, k: (i, 0)),
            scratch_shapes=[pltpu.VMEM((tb, n_pad), jnp.float32)],
        ),
        compiler_params=pltpu.CompilerParams(
            # Batch tiles independent (megacore-shardable); K is a reduction.
            dimension_semantics=("parallel", "arbitrary"),
            vmem_limit_bytes=vmem_limit,
        ),
    )(x_in, w_p, b_p)

    return out_padded[:B, :out_dim]


if __name__ == "__main__":
    # Small shapes consistent with the module: NCHW input, low_dim=32, out_dim=10.
    B, C, H, W = 2, 4, 16, 16
    D = C * H * W
    low_dim, out_dim = 32, 10

    key = jax.random.PRNGKey(0)
    kx, kwb, kbb, kwf, kbf = jax.random.split(key, 5)

    x = jax.random.normal(kx, (B, C, H, W), dtype=jnp.float32)
    # Deterministic synthetic parameters (backbone linear + fc_out).
    w_bb = jax.random.normal(kwb, (D, low_dim), dtype=jnp.float32) * (1.0 / D) ** 0.5
    b_bb = jax.random.normal(kbb, (low_dim,), dtype=jnp.float32) * 0.01
    w_fc = jax.random.normal(kwf, (low_dim, out_dim), dtype=jnp.float32) * (1.0 / low_dim) ** 0.5
    b_fc = jax.random.normal(kbf, (out_dim,), dtype=jnp.float32) * 0.01

    # One-time parameter fusion ("model load" time, not per forward call).
    w_p, b_p = fuse_params(w_bb, b_bb, w_fc, b_fc)

    out = linear_transferred(x, w_p, b_p, out_dim)
    out = jax.block_until_ready(out)

    # Pure-JAX f32 reference of the original (unfused) forward pass.
    feat_ref = x.reshape(B, D) @ w_bb + b_bb
    out_ref = feat_ref @ w_fc + b_fc
    assert out.shape == (B, out_dim)
    # bf16 MXU inputs + fused-weight reassociation -> loosened tolerance.
    assert jnp.allclose(out, out_ref, atol=5e-2, rtol=5e-2)

    print("KERNEL_OK")
</pallas_src>

<mosaic_0001>
module attributes {stable_mosaic.version = 11 : i64} {
  func.func @_fused_linear_kernel(%arg0: i32, %arg1: i32, %arg2: memref<16x1024xf32, #tpu.memory_space<vmem>>, %arg3: memref<1024x128xbf16, #tpu.memory_space<vmem>>, %arg4: memref<1x128xf32, #tpu.memory_space<vmem>>, %arg5: memref<16x128xf32, #tpu.memory_space<vmem>>, %arg6: memref<16x128xf32, #tpu.memory_space<vmem>>) attributes {dimension_semantics = [#tpu.dimension_semantics<parallel>, #tpu.dimension_semantics<arbitrary>], iteration_bounds = array<i64: 1, 1>, scalar_prefetch = 0 : i64, scratch_operands = 1 : i64, tpu.core_type = #tpu.core_type<tc>, window_params = [{transform_indices = @transform_0, window_bounds = array<i64: 16, 1024>}, {transform_indices = @transform_1, window_bounds = array<i64: 1024, 128>}, {pipeline_mode = #tpu.pipeline_mode<synchronous>, transform_indices = @transform_2, window_bounds = array<i64: 1, 128>}, {transform_indices = @transform_3, window_bounds = array<i64: 16, 128>}]} {
    %c0_i32 = arith.constant 0 : i32
    %0 = arith.cmpi eq, %arg1, %c0_i32 : i32
    %1 = arith.extui %0 : i1 to i32
    %c0_i32_0 = arith.constant 0 : i32
    %2 = arith.cmpi ne, %1, %c0_i32_0 : i32
    scf.if %2 {
      %cst_10 = arith.constant 0.000000e+00 : f32
      %13 = vector.broadcast %cst_10 : f32 to vector<16x128xf32>
      %c0_11 = arith.constant 0 : index
      %c0_12 = arith.constant 0 : index
      %14 = vector.load %arg6[%c0_11, %c0_12] : memref<16x128xf32, #tpu.memory_space<vmem>>, vector<16x128xf32>
      tpu.vector_store %arg6[%c0_11, %c0_12], %13 {strides = array<i32>} : memref<16x128xf32, #tpu.memory_space<vmem>>, vector<16x128xf32>,
    } else {
    }
    %c0 = arith.constant 0 : index
    %c0_1 = arith.constant 0 : index
    %3 = vector.load %arg6[%c0, %c0_1] : memref<16x128xf32, #tpu.memory_space<vmem>>, vector<16x128xf32>
    %c0_2 = arith.constant 0 : index
    %c0_3 = arith.constant 0 : index
    %4 = vector.load %arg2[%c0_2, %c0_3] : memref<16x1024xf32, #tpu.memory_space<vmem>>, vector<16x1024xf32>
    %5 = arith.truncf %4 : vector<16x1024xf32> to vector<16x1024xbf16>
    %c0_4 = arith.constant 0 : index
    %c0_5 = arith.constant 0 : index
    %6 = vector.load %arg3[%c0_4, %c0_5] : memref<1024x128xbf16, #tpu.memory_space<vmem>>, vector<1024x128xbf16>
    %cst = arith.constant dense<0.000000e+00> : vector<16x128xf32>
    %7 = tpu.matmul %5, %6, %cst {dimension_numbers = #tpu.dot_dimension_numbers<[1], [0], [0], [1], [0, 0, 1, 1], [], []>} : vector<16x1024xbf16>, vector<1024x128xbf16>, vector<16x128xf32> -> vector<16x128xf32>
    %8 = arith.addf %3, %7 : vector<16x128xf32>
    %c0_6 = arith.constant 0 : index
    %c0_7 = arith.constant 0 : index
    %9 = vector.load %arg6[%c0_6, %c0_7] : memref<16x128xf32, #tpu.memory_space<vmem>>, vector<16x128xf32>
    tpu.vector_store %arg6[%c0_6, %c0_7], %8 {strides = array<i32>} : memref<16x128xf32, #tpu.memory_space<vmem>>, vector<16x128xf32>,
    %c0_i32_8 = arith.constant 0 : i32
    %10 = arith.cmpi eq, %arg1, %c0_i32_8 : i32
    %11 = arith.extui %10 : i1 to i32
    %c0_i32_9 = arith.constant 0 : i32
    %12 = arith.cmpi ne, %11, %c0_i32_9 : i32
    scf.if %12 {
      %c0_10 = arith.constant 0 : index
      %c0_11 = arith.constant 0 : index
      %13 = vector.load %arg6[%c0_10, %c0_11] : memref<16x128xf32, #tpu.memory_space<vmem>>, vector<16x128xf32>
      %c0_12 = arith.constant 0 : index
      %c0_13 = arith.constant 0 : index
      %14 = vector.load %arg4[%c0_12, %c0_13] : memref<1x128xf32, #tpu.memory_space<vmem>>, vector<1x128xf32>
      %15 = vector.broadcast %14 : vector<1x128xf32> to vector<16x128xf32>
      %16 = arith.addf %13, %15 : vector<16x128xf32>
      %c0_14 = arith.constant 0 : index
      %c0_15 = arith.constant 0 : index
      %17 = vector.load %arg5[%c0_14, %c0_15] : memref<16x128xf32, #tpu.memory_space<vmem>>, vector<16x128xf32>
      tpu.vector_store %arg5[%c0_14, %c0_15], %16 {strides = array<i32>} : memref<16x128xf32, #tpu.memory_space<vmem>>, vector<16x128xf32>,
    } else {
    }
    return
  }
  func.func @transform_0(%arg0: i32, %arg1: i32) -> (i32, i32) {
    %c0_i32 = arith.constant 0 : i32
    return %arg0, %arg1 : i32, i32
  }
  func.func @transform_1(%arg0: i32, %arg1: i32) -> (i32, i32) {
    %c0_i32 = arith.constant 0 : i32
    %c0_i32_0 = arith.constant 0 : i32
    return %arg1, %c0_i32 : i32, i32
  }
  func.func @transform_2(%arg0: i32, %arg1: i32) -> (i32, i32) {
    %c0_i32 = arith.constant 0 : i32
    %c0_i32_0 = arith.constant 0 : i32
    %c0_i32_1 = arith.constant 0 : i32
    return %c0_i32, %c0_i32_0 : i32, i32
  }
  func.func @transform_3(%arg0: i32, %arg1: i32) -> (i32, i32) {
    %c0_i32 = arith.constant 0 : i32
    %c0_i32_0 = arith.constant 0 : i32
    return %arg0, %c0_i32 : i32, i32
  }
}

</mosaic_0001>

<llo_original>
// kernel: tpu_custom_call.1
$region0: #{tpu_custom_call.1}
  #allocation0 [shape = 'u32[]', space=smem, size = 0x4, offset = 0x4, fixed_abs, tag = 'smem constant byte address 0x4 - core index']
  #allocation1 [shape = 'u32[144,128]{1,0:T(1,128)}', space=vmem, size = 0x12000, scoped, tag = 'internal scratch']
  #allocation2 [shape = 'f32[16,128]{1,0:T(8,128)}', space=vmem, size = 0x2000, scoped, tag = 'scratch operand']
  %s0 = inlined_call_operand.hbm [shape: f32[16,1024], index: 0, kind: input, shape index: {}]
  %s1 = inlined_call_operand.hbm [shape: bf16[1024,128], index: 1, kind: input, shape index: {}]
  %s2 = inlined_call_operand.vmem [shape: f32[1,128], index: 2, kind: input, shape index: {}]
  %s3 = inlined_call_operand.hbm [shape: f32[16,128], index: 3, kind: output, shape index: {}]
  %s4 = sld [smem:[#allocation0]]
  $region38: #{tpu_custom_call.1} parent=0
    _
  %s6 = ssub.s32 1, %s4
  %s7 = scalar_select 0, %s6, %s4
  $region1: #{tpu_custom_call.1} parent=0
    #allocation3 [shape = 'u8[65536]{0}', space=vmem, size = 0x10000, scoped, tag = 'input window, operand 0, single buffered']
    #allocation4 [shape = 's32[1]{0}', space=sflag, size = 0x4, scoped, tag = 'scoped memory for tpu_custom_call.1']
    #allocation5 [shape = 's32[1]{0}', space=sflag, size = 0x4, scoped, tag = 'scoped memory for tpu_custom_call.1']
    #allocation6 [shape = 'u8[262144]{0}', space=vmem, size = 0x40000, scoped, tag = 'input window, operand 1, single buffered']
    #allocation7 [shape = 's32[1]{0}', space=sflag, size = 0x4, scoped, tag = 'scoped memory for tpu_custom_call.1']
    #allocation8 [shape = 'u8[8192]{0}', space=vmem, size = 0x2000, scoped, tag = 'output window, operand 0, single buffered']
    %8 = vsyncpa [#allocation4], 0
    %9 = vsyncpa [#allocation7], 0
    %10 = vsyncpa [#allocation5], 0
    // Predicated region
    $region2: #{tpu_custom_call.1} parent=1 // pred_check
      _
    $region3: #{tpu_custom_call.1} parent=1 // pred_check_branch
      %12 = sbr.rel (0) target = $region5
    $region4: #{tpu_custom_call.1} parent=1 // pred_region
      %s14 = ssub.s32 2048, 2048
      %15 = vsyncadd [#allocation4], %s14
      %s16 = sshll.u32 [#allocation3], 4
      %s17 = int_to_ptr.vmem [resolvable:$true] %s16
      %22 = dma.hbm_to_vmem [thread:$0]  %s0, 2048, %s17, [#allocation4], 1024, 1024, 64
    $region5: #{tpu_custom_call.1} parent=1 // pred_fallthru
      _
    // Predicated region
    $region6: #{tpu_custom_call.1} parent=1 // pred_check
      _
    $region7: #{tpu_custom_call.1} parent=1 // pred_check_branch
      %24 = sbr.rel (0) target = $region9
    $region8: #{tpu_custom_call.1} parent=1 // pred_region
      %s26 = ssub.s32 8192, 8192
      %27 = vsyncadd [#allocation7], %s26
      %s28 = sshll.u32 [#allocation6], 4
      %s29 = int_to_ptr.vmem [resolvable:$true] %s28
      %34 = dma.hbm_to_vmem [thread:$0]  %s1, 8192, %s29, [#allocation7], 64, 64, 4
    $region9: #{tpu_custom_call.1} parent=1 // pred_fallthru
      _
    // Predicated region
    $region10: #{tpu_custom_call.1} parent=1 // pred_check
      _
    $region11: #{tpu_custom_call.1} parent=1 // pred_check_branch
      %36 = sbr.rel (0) target = $region13
    $region12: #{tpu_custom_call.1} parent=1 // pred_region
      _
    $region13: #{tpu_custom_call.1} parent=1 // pred_fallthru
      _
    // Predicated region
    $region14: #{tpu_custom_call.1} parent=1 // pred_check
      _
    $region15: #{tpu_custom_call.1} parent=1 // pred_check_branch
      %38 = sbr.rel (0) target = $region17
    $region16: #{tpu_custom_call.1} parent=1 // pred_region
      %39 = dma.done [#allocation4], 2048
    $region17: #{tpu_custom_call.1} parent=1 // pred_fallthru
      _
    // Predicated region
    $region18: #{tpu_custom_call.1} parent=1 // pred_check
      _
    $region19: #{tpu_custom_call.1} parent=1 // pred_check_branch
      %41 = sbr.rel (0) target = $region21
    $region20: #{tpu_custom_call.1} parent=1 // pred_region
      %42 = dma.done [#allocation7], 8192
    $region21: #{tpu_custom_call.1} parent=1 // pred_fallthru
      _
    %p44 = scmp.eq.s32.totalorder 0, 0
    // Predicated region
    $region22: #{tpu_custom_call.1} parent=1 // pred_check
      %p45 = pneg %p44
    $region23: #{tpu_custom_call.1} parent=1 // pred_check_branch
      %47 = sbr.rel (%p45) target = $region25
    $region24: #{tpu_custom_call.1} parent=1 // pred_region
      %48 = vst [vmem:[#allocation2] sm:$0xff] 0.0
      %49 = vst [vmem:[#allocation2 + $0x8] sm:$0xff] 0.0
    $region25: #{tpu_custom_call.1} parent=1 // pred_fallthru
      _
    %v50 = vld [vmem:[#allocation2] sm:$0xff]
    %v51 = vld [vmem:[#allocation2 + $0x8] sm:$0xff]
    %v52 = vld [vmem:[#allocation3] sm:$0xff]
    %v53 = vld [vmem:[#allocation3 + $0x8] sm:$0xff]
    %v54 = vld [vmem:[#allocation3 + $0x10] sm:$0xff]
    %v55 = vld [vmem:[#allocation3 + $0x18] sm:$0xff]
    %v56 = vld [vmem:[#allocation3 + $0x20] sm:$0xff]
    %v57 = vld [vmem:[#allocation3 + $0x28] sm:$0xff]
    %v58 = vld [vmem:[#allocation3 + $0x30] sm:$0xff]
    %v59 = vld [vmem:[#allocation3 + $0x38] sm:$0xff]
    %v60 = vld [vmem:[#allocation3 + $0x40] sm:$0xff]
    %v61 = vld [vmem:[#allocation3 + $0x48] sm:$0xff]
    %v62 = vld [vmem:[#allocation3 + $0x50] sm:$0xff]
    %v63 = vld [vmem:[#allocation3 + $0x58] sm:$0xff]
    %v64 = vld [vmem:[#allocation3 + $0x60] sm:$0xff]
    %v65 = vld [vmem:[#allocation3 + $0x68] sm:$0xff]
    %v66 = vld [vmem:[#allocation3 + $0x70] sm:$0xff]
    %v67 = vld [vmem:[#allocation3 + $0x78] sm:$0xff]
    %v68 = vpack.c.bf16 %v60, %v52
    %v69 = vpack.c.bf16 %v61, %v53
    %v70 = vpack.c.bf16 %v62, %v54
    %v71 = vpack.c.bf16 %v63, %v55
    %v72 = vpack.c.bf16 %v64, %v56
    %v73 = vpack.c.bf16 %v65, %v57
    %v74 = vpack.c.bf16 %v66, %v58
    %v75 = vpack.c.bf16 %v67, %v59
    %v76 = vld [vmem:[#allocation6] sm:$0xf]
    %v77 = vld [vmem:[#allocation6 + $0x4] sm:$0xf]
    %v78 = vld [vmem:[#allocation6 + $0x8] sm:$0xf]
    %v79 = vld [vmem:[#allocation6 + $0xc] sm:$0xf]
    %v80 = vld [vmem:[#allocation6 + $0x10] sm:$0xf]
    %v81 = vld [vmem:[#allocation6 + $0x14] sm:$0xf]
    %v82 = vld [vmem:[#allocation6 + $0x18] sm:$0xf]
    %v83 = vld [vmem:[#allocation6 + $0x1c] sm:$0xf]
    %v84 = vld [vmem:[#allocation6 + $0x20] sm:$0xf]
    %v85 = vld [vmem:[#allocation6 + $0x24] sm:$0xf]
    %v86 = vld [vmem:[#allocation6 + $0x28] sm:$0xf]
    %v87 = vld [vmem:[#allocation6 + $0x2c] sm:$0xf]
    %v88 = vld [vmem:[#allocation6 + $0x30] sm:$0xf]
    %v89 = vld [vmem:[#allocation6 + $0x34] sm:$0xf]
    %v90 = vld [vmem:[#allocation6 + $0x38] sm:$0xf]
    %v91 = vld [vmem:[#allocation6 + $0x3c] sm:$0xf]
    %v92 = vld [vmem:[#allocation6 + $0x40] sm:$0xf]
    %v93 = vld [vmem:[#allocation6 + $0x44] sm:$0xf]
    %v94 = vld [vmem:[#allocation6 + $0x48] sm:$0xf]
    %v95 = vld [vmem:[#allocation6 + $0x4c] sm:$0xf]
    %v96 = vld [vmem:[#allocation6 + $0x50] sm:$0xf]
    %v97 = vld [vmem:[#allocation6 + $0x54] sm:$0xf]
    %v98 = vld [vmem:[#allocation6 + $0x58] sm:$0xf]
    %v99 = vld [vmem:[#allocation6 + $0x5c] sm:$0xf]
    %v100 = vld [vmem:[#allocation6 + $0x60] sm:$0xf]
    %v101 = vld [vmem:[#allocation6 + $0x64] sm:$0xf]
    %v102 = vld [vmem:[#allocation6 + $0x68] sm:$0xf]
    %v103 = vld [vmem:[#allocation6 + $0x6c] sm:$0xf]
    %v104 = vld [vmem:[#allocation6 + $0x70] sm:$0xf]
    %v105 = vld [vmem:[#allocation6 + $0x74] sm:$0xf]
    %v106 = vld [vmem:[#allocation6 + $0x78] sm:$0xf]
    %v107 = vld [vmem:[#allocation6 + $0x7c] sm:$0xf]
    %v108 = vld [vmem:[#allocation6 + $0x80] sm:$0xf]
    %v109 = vld [vmem:[#allocation6 + $0x84] sm:$0xf]
    %v110 = vld [vmem:[#allocation6 + $0x88] sm:$0xf]
    %v111 = vld [vmem:[#allocation6 + $0x8c] sm:$0xf]
    %v112 = vld [vmem:[#allocation6 + $0x90] sm:$0xf]
    %v113 = vld [vmem:[#allocation6 + $0x94] sm:$0xf]
    %v114 = vld [vmem:[#allocation6 + $0x98] sm:$0xf]
    %v115 = vld [vmem:[#allocation6 + $0x9c] sm:$0xf]
    %v116 = vld [vmem:[#allocation6 + $0xa0] sm:$0xf]
    %v117 = vld [vmem:[#allocation6 + $0xa4] sm:$0xf]
    %v118 = vld [vmem:[#allocation6 + $0xa8] sm:$0xf]
    %v119 = vld [vmem:[#allocation6 + $0xac] sm:$0xf]
    %v120 = vld [vmem:[#allocation6 + $0xb0] sm:$0xf]
    %v121 = vld [vmem:[#allocation6 + $0xb4] sm:$0xf]
    %v122 = vld [vmem:[#allocation6 + $0xb8] sm:$0xf]
    %v123 = vld [vmem:[#allocation6 + $0xbc] sm:$0xf]
    %v124 = vld [vmem:[#allocation6 + $0xc0] sm:$0xf]
    %v125 = vld [vmem:[#allocation6 + $0xc4] sm:$0xf]
    %v126 = vld [vmem:[#allocation6 + $0xc8] sm:$0xf]
    %v127 = vld [vmem:[#allocation6 + $0xcc] sm:$0xf]
    %v128 = vld [vmem:[#allocation6 + $0xd0] sm:$0xf]
    %v129 = vld [vmem:[#allocation6 + $0xd4] sm:$0xf]
    %v130 = vld [vmem:[#allocation6 + $0xd8] sm:$0xf]
    %v131 = vld [vmem:[#allocation6 + $0xdc] sm:$0xf]
    %v132 = vld [vmem:[#allocation6 + $0xe0] sm:$0xf]
    %v133 = vld [vmem:[#allocation6 + $0xe4] sm:$0xf]
    %v134 = vld [vmem:[#allocation6 + $0xe8] sm:$0xf]
    %v135 = vld [vmem:[#allocation6 + $0xec] sm:$0xf]
    %v136 = vld [vmem:[#allocation6 + $0xf0] sm:$0xf]
    %v137 = vld [vmem:[#allocation6 + $0xf4] sm:$0xf]
    %v138 = vld [vmem:[#allocation6 + $0xf8] sm:$0xf]
    %v139 = vld [vmem:[#allocation6 + $0xfc] sm:$0xf]
    %v140 = vld [vmem:[#allocation6 + $0x100] sm:$0xf]
    %v141 = vld [vmem:[#allocation6 + $0x104] sm:$0xf]
    %v142 = vld [vmem:[#allocation6 + $0x108] sm:$0xf]
    %v143 = vld [vmem:[#allocation6 + $0x10c] sm:$0xf]
    %v144 = vld [vmem:[#allocation6 + $0x110] sm:$0xf]
    %v145 = vld [vmem:[#allocation6 + $0x114] sm:$0xf]
    %v146 = vld [vmem:[#allocation6 + $0x118] sm:$0xf]
    %v147 = vld [vmem:[#allocation6 + $0x11c] sm:$0xf]
    %v148 = vld [vmem:[#allocation6 + $0x120] sm:$0xf]
    %v149 = vld [vmem:[#allocation6 + $0x124] sm:$0xf]
    %v150 = vld [vmem:[#allocation6 + $0x128] sm:$0xf]
    %v151 = vld [vmem:[#allocation6 + $0x12c] sm:$0xf]
    %v152 = vld [vmem:[#allocation6 + $0x130] sm:$0xf]
    %v153 = vld [vmem:[#allocation6 + $0x134] sm:$0xf]
    %v154 = vld [vmem:[#allocation6 + $0x138] sm:$0xf]
    %v155 = vld [vmem:[#allocation6 + $0x13c] sm:$0xf]
    %v156 = vld [vmem:[#allocation6 + $0x140] sm:$0xf]
    %v157 = vld [vmem:[#allocation6 + $0x144] sm:$0xf]
    %v158 = vld [vmem:[#allocation6 + $0x148] sm:$0xf]
    %v159 = vld [vmem:[#allocation6 + $0x14c] sm:$0xf]
    %v160 = vld [vmem:[#allocation6 + $0x150] sm:$0xf]
    %v161 = vld [vmem:[#allocation6 + $0x154] sm:$0xf]
    %v162 = vld [vmem:[#allocation6 + $0x158] sm:$0xf]
    %v163 = vld [vmem:[#allocation6 + $0x15c] sm:$0xf]
    %v164 = vld [vmem:[#allocation6 + $0x160] sm:$0xf]
    %v165 = vld [vmem:[#allocation6 + $0x164] sm:$0xf]
    %v166 = vld [vmem:[#allocation6 + $0x168] sm:$0xf]
    %v167 = vld [vmem:[#allocation6 + $0x16c] sm:$0xf]
    %v168 = vld [vmem:[#allocation6 + $0x170] sm:$0xf]
    %v169 = vld [vmem:[#allocation6 + $0x174] sm:$0xf]
    %v170 = vld [vmem:[#allocation6 + $0x178] sm:$0xf]
    %v171 = vld [vmem:[#allocation6 + $0x17c] sm:$0xf]
    %v172 = vld [vmem:[#allocation6 + $0x180] sm:$0xf]
    %v173 = vld [vmem:[#allocation6 + $0x184] sm:$0xf]
    %v174 = vld [vmem:[#allocation6 + $0x188] sm:$0xf]
    %v175 = vld [vmem:[#allocation6 + $0x18c] sm:$0xf]
    %v176 = vld [vmem:[#allocation6 + $0x190] sm:$0xf]
    %v177 = vld [vmem:[#allocation6 + $0x194] sm:$0xf]
    %v178 = vld [vmem:[#allocation6 + $0x198] sm:$0xf]
    %v179 = vld [vmem:[#allocation6 + $0x19c] sm:$0xf]
    %v180 = vld [vmem:[#allocation6 + $0x1a0] sm:$0xf]
    %v181 = vld [vmem:[#allocation6 + $0x1a4] sm:$0xf]
    %v182 = vld [vmem:[#allocation6 + $0x1a8] sm:$0xf]
    %v183 = vld [vmem:[#allocation6 + $0x1ac] sm:$0xf]
    %v184 = vld [vmem:[#allocation6 + $0x1b0] sm:$0xf]
    %v185 = vld [vmem:[#allocation6 + $0x1b4] sm:$0xf]
    %v186 = vld [vmem:[#allocation6 + $0x1b8] sm:$0xf]
    %v187 = vld [vmem:[#allocation6 + $0x1bc] sm:$0xf]
    %v188 = vld [vmem:[#allocation6 + $0x1c0] sm:$0xf]
    %v189 = vld [vmem:[#allocation6 + $0x1c4] sm:$0xf]
    %v190 = vld [vmem:[#allocation6 + $0x1c8] sm:$0xf]
    %v191 = vld [vmem:[#allocation6 + $0x1cc] sm:$0xf]
    %v192 = vld [vmem:[#allocation6 + $0x1d0] sm:$0xf]
    %v193 = vld [vmem:[#allocation6 + $0x1d4] sm:$0xf]
    %v194 = vld [vmem:[#allocation6 + $0x1d8] sm:$0xf]
    %v195 = vld [vmem:[#allocation6 + $0x1dc] sm:$0xf]
    %v196 = vld [vmem:[#allocation6 + $0x1e0] sm:$0xf]
    %v197 = vld [vmem:[#allocation6 + $0x1e4] sm:$0xf]
    %v198 = vld [vmem:[#allocation6 + $0x1e8] sm:$0xf]
    %v199 = vld [vmem:[#allocation6 + $0x1ec] sm:$0xf]
    %v200 = vld [vmem:[#allocation6 + $0x1f0] sm:$0xf]
    %v201 = vld [vmem:[#allocation6 + $0x1f4] sm:$0xf]
    %v202 = vld [vmem:[#allocation6 + $0x1f8] sm:$0xf]
    %v203 = vld [vmem:[#allocation6 + $0x1fc] sm:$0xf]
    %v332 = vunpack.c.l.b16 %v76
    %v333 = vunpack.c.l.b16 %v77
    %v334 = vunpack.c.l.b16 %v78
    %v335 = vunpack.c.l.b16 %v79
    %v336 = vunpack.c.l.b16 %v80
    %v337 = vunpack.c.l.b16 %v81
    %v338 = vunpack.c.l.b16 %v82
    %v339 = vunpack.c.l.b16 %v83
    %v340 = vunpack.c.l.b16 %v84
    %v341 = vunpack.c.l.b16 %v85
    %v342 = vunpack.c.l.b16 %v86
    %v343 = vunpack.c.l.b16 %v87
    %v344 = vunpack.c.l.b16 %v88
    %v345 = vunpack.c.l.b16 %v89
    %v346 = vunpack.c.l.b16 %v90
    %v347 = vunpack.c.l.b16 %v91
    %v348 = vunpack.c.l.b16 %v92
    %v349 = vunpack.c.l.b16 %v93
    %v350 = vunpack.c.l.b16 %v94
    %v351 = vunpack.c.l.b16 %v95
    %v352 = vunpack.c.l.b16 %v96
    %v353 = vunpack.c.l.b16 %v97
    %v354 = vunpack.c.l.b16 %v98
    %v355 = vunpack.c.l.b16 %v99
    %v356 = vunpack.c.l.b16 %v100
    %v357 = vunpack.c.l.b16 %v101
    %v358 = vunpack.c.l.b16 %v102
    %v359 = vunpack.c.l.b16 %v103
    %v360 = vunpack.c.l.b16 %v104
    %v361 = vunpack.c.l.b16 %v105
    %v362 = vunpack.c.l.b16 %v106
    %v363 = vunpack.c.l.b16 %v107
    %v364 = vunpack.c.l.b16 %v108
    %v365 = vunpack.c.l.b16 %v109
    %v366 = vunpack.c.l.b16 %v110
    %v367 = vunpack.c.l.b16 %v111
    %v368 = vunpack.c.l.b16 %v112
    %v369 = vunpack.c.l.b16 %v113
    %v370 = vunpack.c.l.b16 %v114
    %v371 = vunpack.c.l.b16 %v115
    %v372 = vunpack.c.l.b16 %v116
    %v373 = vunpack.c.l.b16 %v117
    %v374 = vunpack.c.l.b16 %v118
    %v375 = vunpack.c.l.b16 %v119
    %v376 = vunpack.c.l.b16 %v120
    %v377 = vunpack.c.l.b16 %v121
    %v378 = vunpack.c.l.b16 %v122
    %v379 = vunpack.c.l.b16 %v123
    %v380 = vunpack.c.l.b16 %v124
    %v381 = vunpack.c.l.b16 %v125
    %v382 = vunpack.c.l.b16 %v126
    %v383 = vunpack.c.l.b16 %v127
    %v384 = vunpack.c.l.b16 %v128
    %v385 = vunpack.c.l.b16 %v129
    %v386 = vunpack.c.l.b16 %v130
    %v387 = vunpack.c.l.b16 %v131
    %v388 = vunpack.c.l.b16 %v132
    %v389 = vunpack.c.l.b16 %v133
    %v390 = vunpack.c.l.b16 %v134
    %v391 = vunpack.c.l.b16 %v135
    %v392 = vunpack.c.l.b16 %v136
    %v393 = vunpack.c.l.b16 %v137
    %v394 = vunpack.c.l.b16 %v138
    %v395 = vunpack.c.l.b16 %v139
    %v396 = vunpack.c.l.b16 %v140
    %v397 = vunpack.c.l.b16 %v141
    %v398 = vunpack.c.l.b16 %v142
    %v399 = vunpack.c.l.b16 %v143
    %v400 = vunpack.c.l.b16 %v144
    %v401 = vunpack.c.l.b16 %v145
    %v402 = vunpack.c.l.b16 %v146
    %v403 = vunpack.c.l.b16 %v147
    %v404 = vunpack.c.l.b16 %v148
    %v405 = vunpack.c.l.b16 %v149
    %v406 = vunpack.c.l.b16 %v150
    %v407 = vunpack.c.l.b16 %v151
    %v408 = vunpack.c.l.b16 %v152
    %v409 = vunpack.c.l.b16 %v153
    %v410 = vunpack.c.l.b16 %v154
    %v411 = vunpack.c.l.b16 %v155
    %v412 = vunpack.c.l.b16 %v156
    %v413 = vunpack.c.l.b16 %v157
    %v414 = vunpack.c.l.b16 %v158
    %v415 = vunpack.c.l.b16 %v159
    %v416 = vunpack.c.l.b16 %v160
    %v417 = vunpack.c.l.b16 %v161
    %v418 = vunpack.c.l.b16 %v162
    %v419 = vunpack.c.l.b16 %v163
    %v420 = vunpack.c.l.b16 %v164
    %v421 = vunpack.c.l.b16 %v165
    %v422 = vunpack.c.l.b16 %v166
    %v423 = vunpack.c.l.b16 %v167
    %v424 = vunpack.c.l.b16 %v168
    %v425 = vunpack.c.l.b16 %v169
    %v426 = vunpack.c.l.b16 %v170
    %v427 = vunpack.c.l.b16 %v171
    %v428 = vunpack.c.l.b16 %v172
    %v429 = vunpack.c.l.b16 %v173
    %v430 = vunpack.c.l.b16 %v174
    %v431 = vunpack.c.l.b16 %v175
    %v432 = vunpack.c.l.b16 %v176
    %v433 = vunpack.c.l.b16 %v177
    %v434 = vunpack.c.l.b16 %v178
    %v435 = vunpack.c.l.b16 %v179
    %v436 = vunpack.c.l.b16 %v180
    %v437 = vunpack.c.l.b16 %v181
    %v438 = vunpack.c.l.b16 %v182
    %v439 = vunpack.c.l.b16 %v183
    %v440 = vunpack.c.l.b16 %v184
    %v441 = vunpack.c.l.b16 %v185
    %v442 = vunpack.c.l.b16 %v186
    %v443 = vunpack.c.l.b16 %v187
    %v444 = vunpack.c.l.b16 %v188
    %v445 = vunpack.c.l.b16 %v189
    %v446 = vunpack.c.l.b16 %v190
    %v447 = vunpack.c.l.b16 %v191
    %v448 = vunpack.c.l.b16 %v192
    %v449 = vunpack.c.l.b16 %v193
    %v450 = vunpack.c.l.b16 %v194
    %v451 = vunpack.c.l.b16 %v195
    %v452 = vunpack.c.l.b16 %v196
    %v453 = vunpack.c.l.b16 %v197
    %v454 = vunpack.c.l.b16 %v198
    %v455 = vunpack.c.l.b16 %v199
    %v456 = vunpack.c.l.b16 %v200
    %v457 = vunpack.c.l.b16 %v201
    %v458 = vunpack.c.l.b16 %v202
    %v459 = vunpack.c.l.b16 %v203
    %v460 = vpack.c.b16 %v333, %v332
    %v461 = vpack.c.b16 %v335, %v334
    %v462 = vpack.c.b16 %v337, %v336
    %v463 = vpack.c.b16 %v339, %v338
    %v464 = vpack.c.b16 %v341, %v340
    %v465 = vpack.c.b16 %v343, %v342
    %v466 = vpack.c.b16 %v345, %v344
    %v467 = vpack.c.b16 %v347, %v346
    %v468 = vpack.c.b16 %v349, %v348
    %v469 = vpack.c.b16 %v351, %v350
    %v470 = vpack.c.b16 %v353, %v352
    %v471 = vpack.c.b16 %v355, %v354
    %v472 = vpack.c.b16 %v357, %v356
    %v473 = vpack.c.b16 %v359, %v358
    %v474 = vpack.c.b16 %v361, %v360
    %v475 = vpack.c.b16 %v363, %v362
    %v476 = vpack.c.b16 %v365, %v364
    %v477 = vpack.c.b16 %v367, %v366
    %v478 = vpack.c.b16 %v369, %v368
    %v479 = vpack.c.b16 %v371, %v370
    %v480 = vpack.c.b16 %v373, %v372
    %v481 = vpack.c.b16 %v375, %v374
    %v482 = vpack.c.b16 %v377, %v376
    %v483 = vpack.c.b16 %v379, %v378
    %v484 = vpack.c.b16 %v381, %v380
    %v485 = vpack.c.b16 %v383, %v382
    %v486 = vpack.c.b16 %v385, %v384
    %v487 = vpack.c.b16 %v387, %v386
    %v488 = vpack.c.b16 %v389, %v388
    %v489 = vpack.c.b16 %v391, %v390
    %v490 = vpack.c.b16 %v393, %v392
    %v491 = vpack.c.b16 %v395, %v394
    %v492 = vpack.c.b16 %v397, %v396
    %v493 = vpack.c.b16 %v399, %v398
    %v494 = vpack.c.b16 %v401, %v400
    %v495 = vpack.c.b16 %v403, %v402
    %v496 = vpack.c.b16 %v405, %v404
    %v497 = vpack.c.b16 %v407, %v406
    %v498 = vpack.c.b16 %v409, %v408
    %v499 = vpack.c.b16 %v411, %v410
    %v500 = vpack.c.b16 %v413, %v412
    %v501 = vpack.c.b16 %v415, %v414
    %v502 = vpack.c.b16 %v417, %v416
    %v503 = vpack.c.b16 %v419, %v418
    %v504 = vpack.c.b16 %v421, %v420
    %v505 = vpack.c.b16 %v423, %v422
    %v506 = vpack.c.b16 %v425, %v424
    %v507 = vpack.c.b16 %v427, %v426
    %v508 = vpack.c.b16 %v429, %v428
    %v509 = vpack.c.b16 %v431, %v430
    %v510 = vpack.c.b16 %v433, %v432
    %v511 = vpack.c.b16 %v435, %v434
    %v512 = vpack.c.b16 %v437, %v436
    %v513 = vpack.c.b16 %v439, %v438
    %v514 = vpack.c.b16 %v441, %v440
    %v515 = vpack.c.b16 %v443, %v442
    %v516 = vpack.c.b16 %v445, %v444
    %v517 = vpack.c.b16 %v447, %v446
    %v518 = vpack.c.b16 %v449, %v448
    %v519 = vpack.c.b16 %v451, %v450
    %v520 = vpack.c.b16 %v453, %v452
    %v521 = vpack.c.b16 %v455, %v454
    %v522 = vpack.c.b16 %v457, %v456
    %v523 = vpack.c.b16 %v459, %v458
    %588 = vmatprep.subr.bf16.mxu0 0
    %589 = vmatpush1.bf16.msra.mxu0 %v460
    %590 = vmatprep.subr.bf16.mxu0 0
    %591 = vmatpush1.bf16.msra.mxu0 %v461
    %592 = vmatprep.subr.bf16.mxu0 0
    %593 = vmatpush1.bf16.msra.mxu0 %v462
    %594 = vmatprep.subr.bf16.mxu0 0
    %595 = vmatpush1.bf16.msra.mxu0 %v463
    %596 = vmatprep.subr.bf16.mxu0 0
    %597 = vmatpush1.bf16.msra.mxu0 %v464
    %598 = vmatprep.subr.bf16.mxu0 0
    %599 = vmatpush1.bf16.msra.mxu0 %v465
    %600 = vmatprep.subr.bf16.mxu0 0
    %601 = vmatpush1.bf16.msra.mxu0 %v466
    %602 = vmatprep.subr.bf16.mxu0 0
    %603 = vmatpush1.bf16.msra.mxu0 %v467
    %604 = vmatprep.subr.bf16.mxu0 0
    %605 = vmatpush1.bf16.msra.mxu0 %v468
    %606 = vmatprep.subr.bf16.mxu0 0
    %607 = vmatpush1.bf16.msra.mxu0 %v469
    %608 = vmatprep.subr.bf16.mxu0 0
    %609 = vmatpush1.bf16.msra.mxu0 %v470
    %610 = vmatprep.subr.bf16.mxu0 0
    %611 = vmatpush1.bf16.msra.mxu0 %v471
    %612 = vmatprep.subr.bf16.mxu0 0
    %613 = vmatpush1.bf16.msra.mxu0 %v472
    %614 = vmatprep.subr.bf16.mxu0 0
    %615 = vmatpush1.bf16.msra.mxu0 %v473
    %616 = vmatprep.subr.bf16.mxu0 0
    %617 = vmatpush1.bf16.msra.mxu0 %v474
    %618 = vmatprep.subr.bf16.mxu0 0
    %619 = vmatpush1.bf16.msra.mxu0 %v475
    %620 = vmatprep.mubr.bf16.mxu0 %v69
    %621 = vmatmul.mubr.bf16.gmra.mrb[0].mxu0 %v68
    %v622 = vpop.f32.mrb[0].mxu0
    %v623 = vadd.f32 0.0, %v622
    %v624 = vpop.f32.mrb[0].mxu0
    %v625 = vpop.f32.mrb[0].mxu0
    %v626 = vadd.f32 0.0, %v625
    %v627 = vpop.f32.mrb[0].mxu0
    %628 = vdwg.mxu0
    %629 = vmatprep.subr.bf16.mxu0 0
    %630 = vmatpush1.bf16.msra.mxu0 %v476
    %631 = vmatprep.subr.bf16.mxu0 0
    %632 = vmatpush1.bf16.msra.mxu0 %v477
    %633 = vmatprep.subr.bf16.mxu0 0
    %634 = vmatpush1.bf16.msra.mxu0 %v478
    %635 = vmatprep.subr.bf16.mxu0 0
    %636 = vmatpush1.bf16.msra.mxu0 %v479
    %637 = vmatprep.subr.bf16.mxu0 0
    %638 = vmatpush1.bf16.msra.mxu0 %v480
    %639 = vmatprep.subr.bf16.mxu0 0
    %640 = vmatpush1.bf16.msra.mxu0 %v481
    %641 = vmatprep.subr.bf16.mxu0 0
    %642 = vmatpush1.bf16.msra.mxu0 %v482
    %643 = vmatprep.subr.bf16.mxu0 0
    %644 = vmatpush1.bf16.msra.mxu0 %v483
    %645 = vmatprep.subr.bf16.mxu0 0
    %646 = vmatpush1.bf16.msra.mxu0 %v484
    %647 = vmatprep.subr.bf16.mxu0 0
    %648 = vmatpush1.bf16.msra.mxu0 %v485
    %649 = vmatprep.subr.bf16.mxu0 0
    %650 = vmatpush1.bf16.msra.mxu0 %v486
    %651 = vmatprep.subr.bf16.mxu0 0
    %652 = vmatpush1.bf16.msra.mxu0 %v487
    %653 = vmatprep.subr.bf16.mxu0 0
    %654 = vmatpush1.bf16.msra.mxu0 %v488
    %655 = vmatprep.subr.bf16.mxu0 0
    %656 = vmatpush1.bf16.msra.mxu0 %v489
    %657 = vmatprep.subr.bf16.mxu0 0
    %658 = vmatpush1.bf16.msra.mxu0 %v490
    %659 = vmatprep.subr.bf16.mxu0 0
    %660 = vmatpush1.bf16.msra.mxu0 %v491
    %661 = vmatprep.mubr.bf16.mxu0 %v71
    %662 = vmatmul.mubr.bf16.gmra.mrb[0].mxu0 %v70
    %v663 = vpop.f32.mrb[0].mxu0
    %v664 = vadd.f32 %v623, %v663
    %v665 = vpop.f32.mrb[0].mxu0
    %v666 = vpop.f32.mrb[0].mxu0
    %v667 = vadd.f32 %v626, %v666
    %v668 = vpop.f32.mrb[0].mxu0
    %669 = vdwg.mxu0
    %670 = vmatprep.subr.bf16.mxu0 0
    %671 = vmatpush1.bf16.msra.mxu0 %v492
    %672 = vmatprep.subr.bf16.mxu0 0
    %673 = vmatpush1.bf16.msra.mxu0 %v493
    %674 = vmatprep.subr.bf16.mxu0 0
    %675 = vmatpush1.bf16.msra.mxu0 %v494
    %676 = vmatprep.subr.bf16.mxu0 0
    %677 = vmatpush1.bf16.msra.mxu0 %v495
    %678 = vmatprep.subr.bf16.mxu0 0
    %679 = vmatpush1.bf16.msra.mxu0 %v496
    %680 = vmatprep.subr.bf16.mxu0 0
    %681 = vmatpush1.bf16.msra.mxu0 %v497
    %682 = vmatprep.subr.bf16.mxu0 0
    %683 = vmatpush1.bf16.msra.mxu0 %v498
    %684 = vmatprep.subr.bf16.mxu0 0
    %685 = vmatpush1.bf16.msra.mxu0 %v499
    %686 = vmatprep.subr.bf16.mxu0 0
    %687 = vmatpush1.bf16.msra.mxu0 %v500
    %688 = vmatprep.subr.bf16.mxu0 0
    %689 = vmatpush1.bf16.msra.mxu0 %v501
    %690 = vmatprep.subr.bf16.mxu0 0
    %691 = vmatpush1.bf16.msra.mxu0 %v502
    %692 = vmatprep.subr.bf16.mxu0 0
    %693 = vmatpush1.bf16.msra.mxu0 %v503
    %694 = vmatprep.subr.bf16.mxu0 0
    %695 = vmatpush1.bf16.msra.mxu0 %v504
    %696 = vmatprep.subr.bf16.mxu0 0
    %697 = vmatpush1.bf16.msra.mxu0 %v505
    %698 = vmatprep.subr.bf16.mxu0 0
    %699 = vmatpush1.bf16.msra.mxu0 %v506
    %700 = vmatprep.subr.bf16.mxu0 0
    %701 = vmatpush1.bf16.msra.mxu0 %v507
    %702 = vmatprep.mubr.bf16.mxu0 %v73
    %703 = vmatmul.mubr.bf16.gmra.mrb[0].mxu0 %v72
    %v704 = vpop.f32.mrb[0].mxu0
    %v705 = vadd.f32 %v664, %v704
    %v706 = vpop.f32.mrb[0].mxu0
    %v707 = vpop.f32.mrb[0].mxu0
    %v708 = vadd.f32 %v667, %v707
    %v709 = vpop.f32.mrb[0].mxu0
    %710 = vdwg.mxu0
    %711 = vmatprep.subr.bf16.mxu0 0
    %712 = vmatpush1.bf16.msra.mxu0 %v508
    %713 = vmatprep.subr.bf16.mxu0 0
    %714 = vmatpush1.bf16.msra.mxu0 %v509
    %715 = vmatprep.subr.bf16.mxu0 0
    %716 = vmatpush1.bf16.msra.mxu0 %v510
    %717 = vmatprep.subr.bf16.mxu0 0
    %718 = vmatpush1.bf16.msra.mxu0 %v511
    %719 = vmatprep.subr.bf16.mxu0 0
    %720 = vmatpush1.bf16.msra.mxu0 %v512
    %721 = vmatprep.subr.bf16.mxu0 0
    %722 = vmatpush1.bf16.msra.mxu0 %v513
    %723 = vmatprep.subr.bf16.mxu0 0
    %724 = vmatpush1.bf16.msra.mxu0 %v514
    %725 = vmatprep.subr.bf16.mxu0 0
    %726 = vmatpush1.bf16.msra.mxu0 %v515
    %727 = vmatprep.subr.bf16.mxu0 0
    %728 = vmatpush1.bf16.msra.mxu0 %v516
    %729 = vmatprep.subr.bf16.mxu0 0
    %730 = vmatpush1.bf16.msra.mxu0 %v517
    %731 = vmatprep.subr.bf16.mxu0 0
    %732 = vmatpush1.bf16.msra.mxu0 %v518
    %733 = vmatprep.subr.bf16.mxu0 0
    %734 = vmatpush1.bf16.msra.mxu0 %v519
    %735 = vmatprep.subr.bf16.mxu0 0
    %736 = vmatpush1.bf16.msra.mxu0 %v520
    %737 = vmatprep.subr.bf16.mxu0 0
    %738 = vmatpush1.bf16.msra.mxu0 %v521
    %739 = vmatprep.subr.bf16.mxu0 0
    %740 = vmatpush1.bf16.msra.mxu0 %v522
    %741 = vmatprep.subr.bf16.mxu0 0
    %742 = vmatpush1.bf16.msra.mxu0 %v523
    %743 = vmatprep.mubr.bf16.mxu0 %v75
    %744 = vmatmul.mubr.bf16.gmra.mrb[0].mxu0 %v74
    %v745 = vpop.f32.mrb[0].mxu0
    %v746 = vadd.f32 %v705, %v745
    %v747 = vpop.f32.mrb[0].mxu0
    %v748 = vpop.f32.mrb[0].mxu0
    %v749 = vadd.f32 %v708, %v748
    %v750 = vpop.f32.mrb[0].mxu0
    %751 = vdwg.mxu0
    %v752 = vadd.f32 %v50, %v746
    %v753 = vadd.f32 %v51, %v749
    %754 = vst [vmem:[#allocation2] sm:$0xff] %v752
    %755 = vst [vmem:[#allocation2 + $0x8] sm:$0xff] %v753
    // Predicated region
    $region26: #{tpu_custom_call.1} parent=1 // pred_check
      %p756 = pneg %p44
    $region27: #{tpu_custom_call.1} parent=1 // pred_check_branch
      %758 = sbr.rel (%p756) target = $region29
    $region28: #{tpu_custom_call.1} parent=1 // pred_region
      %v759 = vld [vmem:[#allocation2] sm:$0xff]
      %v760 = vld [vmem:[#allocation2 + $0x8] sm:$0xff]
      %v761 = vld [vmem:[%s2] sm:$0x1]
      %v763 = vlaneseq
      %v764 = vshrl.u32 %v763, 7
      %v765 = vsub.s32 0, %v764
      %v766 = vrot.slane %v761, %v765
      %v768 = vadd.f32 %v759, %v766
      %v769 = vadd.f32 %v760, %v766
      %770 = vst [vmem:[#allocation8] sm:$0xff] %v768
      %771 = vst [vmem:[#allocation8 + $0x8] sm:$0xff] %v769
    $region29: #{tpu_custom_call.1} parent=1 // pred_fallthru
      _
    // Predicated region
    $region30: #{tpu_custom_call.1} parent=1 // pred_check
      _
    $region31: #{tpu_custom_call.1} parent=1 // pred_check_branch
      %773 = sbr.rel (0) target = $region33
    $region32: #{tpu_custom_call.1} parent=1 // pred_region
      %s775 = ssub.s32 256, 256
      %776 = vsyncadd [#allocation5], %s775
      %s777 = sshll.u32 [#allocation8], 4
      %s778 = int_to_ptr.vmem [resolvable:$true] %s777
      %783 = dma.vmem_to_hbm [thread:$0]  %s778, 256, %s3, [#allocation5], 128, 128, 8
    $region33: #{tpu_custom_call.1} parent=1 // pred_fallthru
      _
    // Predicated region
    $region34: #{tpu_custom_call.1} parent=1 // pred_check
      _
    $region35: #{tpu_custom_call.1} parent=1 // pred_check_branch
      %785 = sbr.rel (0) target = $region37
    $region36: #{tpu_custom_call.1} parent=1 // pred_region
      %786 = dma.done [#allocation5], 256
    $region37: #{tpu_custom_call.1} parent=1 // pred_fallthru
      _
    %787 = vsyncpa [#allocation4], 1
    %788 = vsyncpa [#allocation7], 1
    %789 = vsyncpa [#allocation5], 1

</llo_original>
